<compile_context>
chip_gen: v6e
topology: v6e:2x2x1
jax: 0.10.0
libtpu: 0.0.40
codegen_flags: <defaults>
</compile_context>

<pallas_src>
import jax
import jax.numpy as jnp
from jax.experimental import pallas as pl
from jax.experimental.pallas import tpu as pltpu


def _round_up(n, m):
    return ((n + m - 1) // m) * m


def mlp_kernel(x_ref, w1_ref, b1_ref, w2_ref, b2_ref, w3_ref, b3_ref, o_ref):
    # layer_input: Linear + ReLU  (bf16 MXU inputs, f32 accumulation)
    h1 = jnp.dot(x_ref[...], w1_ref[...], preferred_element_type=jnp.float32)
    h1 = jnp.maximum(h1 + b1_ref[...], 0.0)
    # layer_hidden: Linear + ReLU
    h2 = jnp.dot(h1.astype(jnp.bfloat16), w2_ref[...],
                 preferred_element_type=jnp.float32)
    h2 = jnp.maximum(h2 + b2_ref[...], 0.0)
    # layer_output: Linear (no activation)
    out = jnp.dot(h2.astype(jnp.bfloat16), w3_ref[...],
                  preferred_element_type=jnp.float32) + b3_ref[...]
    o_ref[...] = out.astype(o_ref.dtype)


def mlp_forward(x, params, *, block_batch=256):
    """Fused MLP forward. x: (B, dim_in). Returns (B, dim_out) in x.dtype."""
    w1, b1, w2, b2, w3, b3 = params
    B, dim_in = x.shape
    dim1 = w1.shape[1]
    dim2 = w2.shape[1]
    dim_out = w3.shape[1]
    out_dtype = x.dtype

    # ---- lane-dense output: pad dim_out (and w3/b3 columns) to a multiple of 128 ----
    dim_out_p = _round_up(dim_out, 128)
    if dim_out_p != dim_out:
        w3 = jnp.pad(w3, ((0, 0), (0, dim_out_p - dim_out)))
        b3 = jnp.pad(b3, ((0, 0), (0, dim_out_p - dim_out)))

    # ---- batch tiling (real tile so the grid has many pipelined steps) ----
    if B <= block_batch:
        tm = B                                 # single full-extent tile
        Bp = B
    else:
        tm = _round_up(block_batch, 16)        # bf16 sublane packing = 16 rows
        Bp = _round_up(B, tm)
    if Bp != B:
        x = jnp.pad(x, ((0, Bp - B), (0, 0)))
    grid = (Bp // tm,)

    # ---- dtypes: bf16 into the MXU, f32 biases / accumulation / output ----
    x_in = x.astype(jnp.bfloat16)
    w1_in = w1.astype(jnp.bfloat16)
    w2_in = w2.astype(jnp.bfloat16)
    w3_in = w3.astype(jnp.bfloat16)
    b1_in = b1.astype(jnp.float32)
    b2_in = b2.astype(jnp.float32)
    b3_in = b3.astype(jnp.float32)

    # ---- explicit VMEM budget: Pallas double-buffers every spec'd operand,
    #      including the grid-invariant weights, plus live f32 h1/h2 slabs. ----
    BF16, F32 = 2, 4
    per_step = (
        2 * tm * dim_in * BF16                                            # x tile x2
        + 2 * (dim_in * dim1 + dim1 * dim2 + dim2 * dim_out_p) * BF16     # weights x2
        + 2 * (dim1 + dim2 + dim_out_p) * F32                             # biases x2
        + 2 * tm * dim_out_p * F32                                        # out tile x2
        + tm * (dim1 + dim2) * F32                                        # h1 / h2
    )
    # 60 MiB ceiling keeps the request valid on v7x's 64 MiB/TC VMEM.
    vmem_limit_bytes = min(max(per_step + (4 << 20), 32 << 20), 60 << 20)

    cost = pl.CostEstimate(
        flops=2 * Bp * (dim_in * dim1 + dim1 * dim2 + dim2 * dim_out_p),
        transcendentals=0,
        bytes_accessed=(
            Bp * dim_in * BF16
            + (dim_in * dim1 + dim1 * dim2 + dim2 * dim_out_p) * BF16
            + (dim1 + dim2 + dim_out_p) * F32
            + Bp * dim_out_p * F32
        ),
    )

    out_padded = pl.pallas_call(
        mlp_kernel,
        out_shape=jax.ShapeDtypeStruct((Bp, dim_out_p), out_dtype),
        grid_spec=pltpu.PrefetchScalarGridSpec(
            num_scalar_prefetch=0,
            grid=grid,
            in_specs=[
                pl.BlockSpec((tm, dim_in), lambda i: (i, 0)),       # x (batch-tiled)
                pl.BlockSpec((dim_in, dim1), lambda i: (0, 0)),     # w1 (resident)
                pl.BlockSpec((1, dim1), lambda i: (0, 0)),          # b1
                pl.BlockSpec((dim1, dim2), lambda i: (0, 0)),       # w2 (resident)
                pl.BlockSpec((1, dim2), lambda i: (0, 0)),          # b2
                pl.BlockSpec((dim2, dim_out_p), lambda i: (0, 0)),  # w3 (padded, resident)
                pl.BlockSpec((1, dim_out_p), lambda i: (0, 0)),     # b3 (padded)
            ],
            out_specs=pl.BlockSpec((tm, dim_out_p), lambda i: (i, 0)),
        ),
        compiler_params=pltpu.CompilerParams(
            dimension_semantics=("parallel",),
            vmem_limit_bytes=vmem_limit_bytes,
        ),
        cost_estimate=cost,
    )(x_in, w1_in, b1_in, w2_in, b2_in, w3_in, b3_in)

    # Slice off batch padding and the lane-padding of the output features.
    return out_padded[:B, :dim_out]


def init_mlp_params(key, dim_in, dim1_hidden, dim2_hidden, dim_out):
    """PyTorch-Linear-style uniform(-1/sqrt(fan_in), +1/sqrt(fan_in)) init.

    Weights stored as (in, out) == torch weight.T; biases as (1, out).
    """
    def linear(k, fan_in, fan_out):
        kw, kb = jax.random.split(k)
        bound = 1.0 / jnp.sqrt(fan_in)
        w = jax.random.uniform(kw, (fan_in, fan_out), jnp.float32, -bound, bound)
        b = jax.random.uniform(kb, (1, fan_out), jnp.float32, -bound, bound)
        return w, b

    k1, k2, k3 = jax.random.split(key, 3)
    w1, b1 = linear(k1, dim_in, dim1_hidden)
    w2, b2 = linear(k2, dim1_hidden, dim2_hidden)
    w3, b3 = linear(k3, dim2_hidden, dim_out)
    return (w1, b1, w2, b2, w3, b3)


def mlp_reference(x, params):
    w1, b1, w2, b2, w3, b3 = params
    h1 = jnp.maximum(x @ w1 + b1, 0.0)
    h2 = jnp.maximum(h1 @ w2 + b2, 0.0)
    return h2 @ w3 + b3


if __name__ == "__main__":
    # Small shapes consistent with the module: x is (batch, dim_in).
    batch, dim_in, dim1_hidden, dim2_hidden, dim_out = 32, 64, 128, 64, 32

    key = jax.random.PRNGKey(0)
    kx, kp = jax.random.split(key)
    x = jax.random.normal(kx, (batch, dim_in), jnp.float32)
    params = init_mlp_params(kp, dim_in, dim1_hidden, dim2_hidden, dim_out)

    out = mlp_forward(x, params)
    out = jax.block_until_ready(out)

    ref = mlp_reference(x, params)  # pure f32 reference
    assert out.shape == (batch, dim_out), out.shape
    # bf16 MXU inputs with f32 accumulation: relaxed tolerance vs the f32 reference.
    max_err = float(jnp.max(jnp.abs(out - ref)))
    assert jnp.allclose(out, ref, atol=5e-2, rtol=5e-2), f"mismatch, max_err={max_err}"

    print("KERNEL_OK")
</pallas_src>

<mosaic_0001>
module attributes {stable_mosaic.version = 11 : i64} {
  func.func @mlp_kernel(%arg0: i32, %arg1: memref<32x64xbf16, #tpu.memory_space<vmem>>, %arg2: memref<64x128xbf16, #tpu.memory_space<vmem>>, %arg3: memref<1x128xf32, #tpu.memory_space<vmem>>, %arg4: memref<128x64xbf16, #tpu.memory_space<vmem>>, %arg5: memref<1x64xf32, #tpu.memory_space<vmem>>, %arg6: memref<64x128xbf16, #tpu.memory_space<vmem>>, %arg7: memref<1x128xf32, #tpu.memory_space<vmem>>, %arg8: memref<32x128xf32, #tpu.memory_space<vmem>>) attributes {dimension_semantics = [#tpu.dimension_semantics<parallel>], iteration_bounds = array<i64: 1>, scalar_prefetch = 0 : i64, scratch_operands = 0 : i64, tpu.core_type = #tpu.core_type<tc>, window_params = [{transform_indices = @transform_0, window_bounds = array<i64: 32, 64>}, {pipeline_mode = #tpu.pipeline_mode<synchronous>, transform_indices = @transform_1, window_bounds = array<i64: 64, 128>}, {pipeline_mode = #tpu.pipeline_mode<synchronous>, transform_indices = @transform_2, window_bounds = array<i64: 1, 128>}, {pipeline_mode = #tpu.pipeline_mode<synchronous>, transform_indices = @transform_3, window_bounds = array<i64: 128, 64>}, {pipeline_mode = #tpu.pipeline_mode<synchronous>, transform_indices = @transform_4, window_bounds = array<i64: 1, 64>}, {pipeline_mode = #tpu.pipeline_mode<synchronous>, transform_indices = @transform_5, window_bounds = array<i64: 64, 128>}, {pipeline_mode = #tpu.pipeline_mode<synchronous>, transform_indices = @transform_6, window_bounds = array<i64: 1, 128>}, {transform_indices = @transform_7, window_bounds = array<i64: 32, 128>}]} {
    %c0 = arith.constant 0 : index
    %c0_0 = arith.constant 0 : index
    %0 = vector.load %arg1[%c0, %c0_0] : memref<32x64xbf16, #tpu.memory_space<vmem>>, vector<32x64xbf16>
    %c0_1 = arith.constant 0 : index
    %c0_2 = arith.constant 0 : index
    %1 = vector.load %arg2[%c0_1, %c0_2] : memref<64x128xbf16, #tpu.memory_space<vmem>>, vector<64x128xbf16>
    %cst = arith.constant dense<0.000000e+00> : vector<32x128xf32>
    %2 = tpu.matmul %0, %1, %cst {dimension_numbers = #tpu.dot_dimension_numbers<[1], [0], [0], [1], [0, 0, 1, 1], [], []>} : vector<32x64xbf16>, vector<64x128xbf16>, vector<32x128xf32> -> vector<32x128xf32>
    %c0_3 = arith.constant 0 : index
    %c0_4 = arith.constant 0 : index
    %3 = vector.load %arg3[%c0_3, %c0_4] : memref<1x128xf32, #tpu.memory_space<vmem>>, vector<1x128xf32>
    %4 = vector.broadcast %3 : vector<1x128xf32> to vector<32x128xf32>
    %5 = arith.addf %2, %4 : vector<32x128xf32>
    %cst_5 = arith.constant 0.000000e+00 : f32
    %6 = vector.broadcast %cst_5 : f32 to vector<32x128xf32>
    %7 = arith.maximumf %5, %6 : vector<32x128xf32>
    %8 = arith.truncf %7 : vector<32x128xf32> to vector<32x128xbf16>
    %c0_6 = arith.constant 0 : index
    %c0_7 = arith.constant 0 : index
    %9 = vector.load %arg4[%c0_6, %c0_7] : memref<128x64xbf16, #tpu.memory_space<vmem>>, vector<128x64xbf16>
    %cst_8 = arith.constant dense<0.000000e+00> : vector<32x64xf32>
    %10 = tpu.matmul %8, %9, %cst_8 {dimension_numbers = #tpu.dot_dimension_numbers<[1], [0], [0], [1], [0, 0, 1, 1], [], []>} : vector<32x128xbf16>, vector<128x64xbf16>, vector<32x64xf32> -> vector<32x64xf32>
    %c0_9 = arith.constant 0 : index
    %c0_10 = arith.constant 0 : index
    %11 = vector.load %arg5[%c0_9, %c0_10] : memref<1x64xf32, #tpu.memory_space<vmem>>, vector<1x64xf32>
    %12 = vector.broadcast %11 : vector<1x64xf32> to vector<32x64xf32>
    %13 = arith.addf %10, %12 : vector<32x64xf32>
    %cst_11 = arith.constant 0.000000e+00 : f32
    %14 = vector.broadcast %cst_11 : f32 to vector<32x64xf32>
    %15 = arith.maximumf %13, %14 : vector<32x64xf32>
    %16 = arith.truncf %15 : vector<32x64xf32> to vector<32x64xbf16>
    %c0_12 = arith.constant 0 : index
    %c0_13 = arith.constant 0 : index
    %17 = vector.load %arg6[%c0_12, %c0_13] : memref<64x128xbf16, #tpu.memory_space<vmem>>, vector<64x128xbf16>
    %cst_14 = arith.constant dense<0.000000e+00> : vector<32x128xf32>
    %18 = tpu.matmul %16, %17, %cst_14 {dimension_numbers = #tpu.dot_dimension_numbers<[1], [0], [0], [1], [0, 0, 1, 1], [], []>} : vector<32x64xbf16>, vector<64x128xbf16>, vector<32x128xf32> -> vector<32x128xf32>
    %c0_15 = arith.constant 0 : index
    %c0_16 = arith.constant 0 : index
    %19 = vector.load %arg7[%c0_15, %c0_16] : memref<1x128xf32, #tpu.memory_space<vmem>>, vector<1x128xf32>
    %20 = vector.broadcast %19 : vector<1x128xf32> to vector<32x128xf32>
    %21 = arith.addf %18, %20 : vector<32x128xf32>
    %c0_17 = arith.constant 0 : index
    %c0_18 = arith.constant 0 : index
    %22 = vector.load %arg8[%c0_17, %c0_18] : memref<32x128xf32, #tpu.memory_space<vmem>>, vector<32x128xf32>
    tpu.vector_store %arg8[%c0_17, %c0_18], %21 {strides = array<i32>} : memref<32x128xf32, #tpu.memory_space<vmem>>, vector<32x128xf32>,
    return
  }
  func.func @transform_0(%arg0: i32) -> (i32, i32) {
    %c0_i32 = arith.constant 0 : i32
    %c0_i32_0 = arith.constant 0 : i32
    return %arg0, %c0_i32 : i32, i32
  }
  func.func @transform_1(%arg0: i32) -> (i32, i32) {
    %c0_i32 = arith.constant 0 : i32
    %c0_i32_0 = arith.constant 0 : i32
    %c0_i32_1 = arith.constant 0 : i32
    return %c0_i32, %c0_i32_0 : i32, i32
  }
  func.func @transform_2(%arg0: i32) -> (i32, i32) {
    %c0_i32 = arith.constant 0 : i32
    %c0_i32_0 = arith.constant 0 : i32
    %c0_i32_1 = arith.constant 0 : i32
    return %c0_i32, %c0_i32_0 : i32, i32
  }
  func.func @transform_3(%arg0: i32) -> (i32, i32) {
    %c0_i32 = arith.constant 0 : i32
    %c0_i32_0 = arith.constant 0 : i32
    %c0_i32_1 = arith.constant 0 : i32
    return %c0_i32, %c0_i32_0 : i32, i32
  }
  func.func @transform_4(%arg0: i32) -> (i32, i32) {
    %c0_i32 = arith.constant 0 : i32
    %c0_i32_0 = arith.constant 0 : i32
    %c0_i32_1 = arith.constant 0 : i32
    return %c0_i32, %c0_i32_0 : i32, i32
  }
  func.func @transform_5(%arg0: i32) -> (i32, i32) {
    %c0_i32 = arith.constant 0 : i32
    %c0_i32_0 = arith.constant 0 : i32
    %c0_i32_1 = arith.constant 0 : i32
    return %c0_i32, %c0_i32_0 : i32, i32
  }
  func.func @transform_6(%arg0: i32) -> (i32, i32) {
    %c0_i32 = arith.constant 0 : i32
    %c0_i32_0 = arith.constant 0 : i32
    %c0_i32_1 = arith.constant 0 : i32
    return %c0_i32, %c0_i32_0 : i32, i32
  }
  func.func @transform_7(%arg0: i32) -> (i32, i32) {
    %c0_i32 = arith.constant 0 : i32
    %c0_i32_0 = arith.constant 0 : i32
    return %arg0, %c0_i32 : i32, i32
  }
}

</mosaic_0001>

<llo_original>
// kernel: tpu_custom_call.1
$region0: #{tpu_custom_call.1}
  #allocation0 [shape = 'u32[]', space=smem, size = 0x4, offset = 0x4, fixed_abs, tag = 'smem constant byte address 0x4 - core index']
  #allocation1 [shape = 'u32[144,128]{1,0:T(1,128)}', space=vmem, size = 0x12000, scoped, tag = 'internal scratch']
  %s0 = inlined_call_operand.vmem [shape: bf16[32,64], index: 0, kind: input, shape index: {}]
  %s1 = inlined_call_operand.vmem [shape: bf16[64,128], index: 1, kind: input, shape index: {}]
  %s2 = inlined_call_operand.vmem [shape: f32[1,128], index: 2, kind: input, shape index: {}]
  %s3 = inlined_call_operand.vmem [shape: bf16[128,64], index: 3, kind: input, shape index: {}]
  %s4 = inlined_call_operand.vmem [shape: f32[1,64], index: 4, kind: input, shape index: {}]
  %s5 = inlined_call_operand.vmem [shape: bf16[64,128], index: 5, kind: input, shape index: {}]
  %s6 = inlined_call_operand.vmem [shape: f32[1,128], index: 6, kind: input, shape index: {}]
  %s7 = inlined_call_operand.hbm [shape: f32[32,128], index: 7, kind: output, shape index: {}]
  %s8 = sld [smem:[#allocation0]]
  $region38: #{tpu_custom_call.1} parent=0
    _
  %s10 = ssub.s32 1, %s8
  %s11 = scalar_select 0, %s10, %s8
  $region1: #{tpu_custom_call.1} parent=0
    #allocation2 [shape = 'u8[16384]{0}', space=vmem, size = 0x4000, scoped, tag = 'output window, operand 0, single buffered']
    #allocation3 [shape = 's32[1]{0}', space=sflag, size = 0x4, scoped, tag = 'scoped memory for tpu_custom_call.1']
    %12 = vsyncpa [#allocation3], 0
    // Predicated region
    $region2: #{tpu_custom_call.1} parent=1 // pred_check
      _
    $region3: #{tpu_custom_call.1} parent=1 // pred_check_branch
      %14 = sbr.rel (0) target = $region5
    $region4: #{tpu_custom_call.1} parent=1 // pred_region
      _
    $region5: #{tpu_custom_call.1} parent=1 // pred_fallthru
      _
    // Predicated region
    $region6: #{tpu_custom_call.1} parent=1 // pred_check
      _
    $region7: #{tpu_custom_call.1} parent=1 // pred_check_branch
      %16 = sbr.rel (0) target = $region9
    $region8: #{tpu_custom_call.1} parent=1 // pred_region
      _
    $region9: #{tpu_custom_call.1} parent=1 // pred_fallthru
      _
    // Predicated region
    $region10: #{tpu_custom_call.1} parent=1 // pred_check
      _
    $region11: #{tpu_custom_call.1} parent=1 // pred_check_branch
      %18 = sbr.rel (0) target = $region13
    $region12: #{tpu_custom_call.1} parent=1 // pred_region
      _
    $region13: #{tpu_custom_call.1} parent=1 // pred_fallthru
      _
    // Predicated region
    $region14: #{tpu_custom_call.1} parent=1 // pred_check
      _
    $region15: #{tpu_custom_call.1} parent=1 // pred_check_branch
      %20 = sbr.rel (0) target = $region17
    $region16: #{tpu_custom_call.1} parent=1 // pred_region
      _
    $region17: #{tpu_custom_call.1} parent=1 // pred_fallthru
      _
    // Predicated region
    $region18: #{tpu_custom_call.1} parent=1 // pred_check
      _
    $region19: #{tpu_custom_call.1} parent=1 // pred_check_branch
      %22 = sbr.rel (0) target = $region21
    $region20: #{tpu_custom_call.1} parent=1 // pred_region
      _
    $region21: #{tpu_custom_call.1} parent=1 // pred_fallthru
      _
    // Predicated region
    $region22: #{tpu_custom_call.1} parent=1 // pred_check
      _
    $region23: #{tpu_custom_call.1} parent=1 // pred_check_branch
      %24 = sbr.rel (0) target = $region25
    $region24: #{tpu_custom_call.1} parent=1 // pred_region
      _
    $region25: #{tpu_custom_call.1} parent=1 // pred_fallthru
      _
    // Predicated region
    $region26: #{tpu_custom_call.1} parent=1 // pred_check
      _
    $region27: #{tpu_custom_call.1} parent=1 // pred_check_branch
      %26 = sbr.rel (0) target = $region29
    $region28: #{tpu_custom_call.1} parent=1 // pred_region
      _
    $region29: #{tpu_custom_call.1} parent=1 // pred_fallthru
      _
    %v28 = vld [vmem:[%s0] sm:$0xf]
    %v29 = vld [vmem:[%s0 + $0x4] sm:$0xf]
    %v30 = vld [vmem:[%s0 + $0x8] sm:$0xf]
    %v31 = vld [vmem:[%s0 + $0xc] sm:$0xf]
    %v32 = vld [vmem:[%s1] sm:$0xf]
    %v33 = vld [vmem:[%s1 + $0x4] sm:$0xf]
    %v34 = vld [vmem:[%s1 + $0x8] sm:$0xf]
    %v35 = vld [vmem:[%s1 + $0xc] sm:$0xf]
    %v36 = vld [vmem:[%s1 + $0x10] sm:$0xf]
    %v37 = vld [vmem:[%s1 + $0x14] sm:$0xf]
    %v38 = vld [vmem:[%s1 + $0x18] sm:$0xf]
    %v39 = vld [vmem:[%s1 + $0x1c] sm:$0xf]
    %v40 = vld [vmem:[%s2] sm:$0x1]
    %v42 = vlaneseq
    %v43 = vshrl.u32 %v42, 7
    %v44 = vsub.s32 0, %v43
    %v45 = vrot.slane %v40, %v44
    %v51 = vunpack.c.l.b16 %v28
    %v52 = vunpack.c.l.b16 %v29
    %v53 = vunpack.c.l.b16 %v30
    %v54 = vunpack.c.l.b16 %v31
    %v55 = vpack.c.b16 %v52, %v51
    %v56 = vpack.c.b16 %v54, %v53
    %v65 = vunpack.c.l.b16 %v32
    %v66 = vunpack.c.l.b16 %v33
    %v67 = vunpack.c.l.b16 %v34
    %v68 = vunpack.c.l.b16 %v35
    %v69 = vunpack.c.l.b16 %v36
    %v70 = vunpack.c.l.b16 %v37
    %v71 = vunpack.c.l.b16 %v38
    %v72 = vunpack.c.l.b16 %v39
    %v73 = vpack.c.b16 %v66, %v65
    %v74 = vpack.c.b16 %v68, %v67
    %v75 = vpack.c.b16 %v70, %v69
    %v76 = vpack.c.b16 %v72, %v71
    %vm81 = vcmask 523264
    %v83 = vsel %vm81, %v55, 0
    %v86 = vsel %vm81, %v56, 0
    %88 = vmatprep.subr.bf16.mxu0 0
    %89 = vmatpush1.bf16.msra.mxu0 0
    %90 = vmatprep.subr.bf16.mxu0 0
    %91 = vmatpush1.bf16.msra.mxu0 0
    %92 = vmatprep.subr.bf16.mxu0 0
    %93 = vmatpush1.bf16.msra.mxu0 0
    %94 = vmatprep.subr.bf16.mxu0 0
    %95 = vmatpush1.bf16.msra.mxu0 0
    %96 = vmatprep.subr.bf16.mxu0 0
    %97 = vmatpush1.bf16.msra.mxu0 %v76
    %98 = vmatprep.subr.bf16.mxu0 0
    %99 = vmatpush1.bf16.msra.mxu0 %v75
    %100 = vmatprep.subr.bf16.mxu0 0
    %101 = vmatpush1.bf16.msra.mxu0 %v74
    %102 = vmatprep.subr.bf16.mxu0 0
    %103 = vmatpush1.bf16.msra.mxu0 %v73
    %104 = vmatprep.subr.bf16.mxu0 0
    %105 = vmatpush2.bf16.msra.mxu0 0
    %106 = vmatprep.subr.bf16.mxu0 0
    %107 = vmatpush2.bf16.msra.mxu0 0
    %108 = vmatprep.subr.bf16.mxu0 0
    %109 = vmatpush2.bf16.msra.mxu0 0
    %110 = vmatprep.subr.bf16.mxu0 0
    %111 = vmatpush2.bf16.msra.mxu0 0
    %112 = vmatprep.subr.bf16.mxu0 0
    %113 = vmatpush2.bf16.msra.mxu0 0
    %114 = vmatprep.subr.bf16.mxu0 0
    %115 = vmatpush2.bf16.msra.mxu0 0
    %116 = vmatprep.subr.bf16.mxu0 0
    %117 = vmatpush2.bf16.msra.mxu0 0
    %118 = vmatprep.subr.bf16.mxu0 0
    %119 = vmatpush2.bf16.msra.mxu0 0
    %120 = vmatprep.mubr.bf16.mxu0 0
    %121 = vmatmul.mubr.bf16.gmra.mxu0 %v83
    %v122 = vpop.f32.mrf.mxu0
    %v123 = vadd.f32 %v45, %v122
    %v124 = vpop.f32.mrf.mxu0
    %v125 = vpop.f32.mrf.mxu0
    %v126 = vadd.f32 %v45, %v125
    %v127 = vpop.f32.mrf.mxu0
    %128 = vmatprep.mubr.bf16.mxu0 0
    %129 = vmatmul.mubr.bf16.gmra.mxu0 %v86
    %v130 = vpop.f32.mrf.mxu0
    %v131 = vadd.f32 %v45, %v130
    %v132 = vpop.f32.mrf.mxu0
    %v133 = vpop.f32.mrf.mxu0
    %v134 = vadd.f32 %v45, %v133
    %v135 = vpop.f32.mrf.mxu0
    %136 = vdwg.mxu0
    %v137 = vmax.f32 %v123, 0.0
    %v138 = vmax.f32 %v126, 0.0
    %v139 = vmax.f32 %v131, 0.0
    %v140 = vmax.f32 %v134, 0.0
    %v141 = vpack.c.bf16 %v138, %v137
    %v142 = vpack.c.bf16 %v140, %v139
    %v143 = vld [vmem:[%s3] sm:$0xf]
    %v144 = vld [vmem:[%s3 + $0x4] sm:$0xf]
    %v145 = vld [vmem:[%s3 + $0x8] sm:$0xf]
    %v146 = vld [vmem:[%s3 + $0xc] sm:$0xf]
    %v147 = vld [vmem:[%s3 + $0x10] sm:$0xf]
    %v148 = vld [vmem:[%s3 + $0x14] sm:$0xf]
    %v149 = vld [vmem:[%s3 + $0x18] sm:$0xf]
    %v150 = vld [vmem:[%s3 + $0x1c] sm:$0xf]
    %v151 = vld [vmem:[%s3 + $0x20] sm:$0xf]
    %v152 = vld [vmem:[%s3 + $0x24] sm:$0xf]
    %v153 = vld [vmem:[%s3 + $0x28] sm:$0xf]
    %v154 = vld [vmem:[%s3 + $0x2c] sm:$0xf]
    %v155 = vld [vmem:[%s3 + $0x30] sm:$0xf]
    %v156 = vld [vmem:[%s3 + $0x34] sm:$0xf]
    %v157 = vld [vmem:[%s3 + $0x38] sm:$0xf]
    %v158 = vld [vmem:[%s3 + $0x3c] sm:$0xf]
    %v159 = vld [vmem:[%s4] sm:$0x1]
    %v161 = vlaneseq
    %v162 = vshrl.u32 %v161, 7
    %v163 = vsub.s32 0, %v162
    %v164 = vrot.slane %v159, %v163
    %v182 = vunpack.c.l.b16 %v143
    %v183 = vunpack.c.l.b16 %v144
    %v184 = vunpack.c.l.b16 %v145
    %v185 = vunpack.c.l.b16 %v146
    %v186 = vunpack.c.l.b16 %v147
    %v187 = vunpack.c.l.b16 %v148
    %v188 = vunpack.c.l.b16 %v149
    %v189 = vunpack.c.l.b16 %v150
    %v190 = vunpack.c.l.b16 %v151
    %v191 = vunpack.c.l.b16 %v152
    %v192 = vunpack.c.l.b16 %v153
    %v193 = vunpack.c.l.b16 %v154
    %v194 = vunpack.c.l.b16 %v155
    %v195 = vunpack.c.l.b16 %v156
    %v196 = vunpack.c.l.b16 %v157
    %v197 = vunpack.c.l.b16 %v158
    %v198 = vpack.c.b16 %v183, %v182
    %v199 = vpack.c.b16 %v185, %v184
    %v200 = vpack.c.b16 %v187, %v186
    %v201 = vpack.c.b16 %v189, %v188
    %v202 = vpack.c.b16 %v191, %v190
    %v203 = vpack.c.b16 %v193, %v192
    %v204 = vpack.c.b16 %v195, %v194
    %v205 = vpack.c.b16 %v197, %v196
    %214 = vmatprep.subr.bf16.mxu0 0
    %215 = vmatpush1.bf16.msra.mxu0 %v205
    %216 = vmatprep.subr.bf16.mxu0 0
    %217 = vmatpush1.bf16.msra.mxu0 %v204
    %218 = vmatprep.subr.bf16.mxu0 0
    %219 = vmatpush1.bf16.msra.mxu0 %v203
    %220 = vmatprep.subr.bf16.mxu0 0
    %221 = vmatpush1.bf16.msra.mxu0 %v202
    %222 = vmatprep.subr.bf16.mxu0 0
    %223 = vmatpush1.bf16.msra.mxu0 %v201
    %224 = vmatprep.subr.bf16.mxu0 0
    %225 = vmatpush1.bf16.msra.mxu0 %v200
    %226 = vmatprep.subr.bf16.mxu0 0
    %227 = vmatpush1.bf16.msra.mxu0 %v199
    %228 = vmatprep.subr.bf16.mxu0 0
    %229 = vmatpush1.bf16.msra.mxu0 %v198
    %230 = vmatprep.subr.bf16.mxu0 0
    %231 = vmatpush2.bf16.msra.mxu0 0
    %232 = vmatprep.subr.bf16.mxu0 0
    %233 = vmatpush2.bf16.msra.mxu0 0
    %234 = vmatprep.subr.bf16.mxu0 0
    %235 = vmatpush2.bf16.msra.mxu0 0
    %236 = vmatprep.subr.bf16.mxu0 0
    %237 = vmatpush2.bf16.msra.mxu0 0
    %238 = vmatprep.subr.bf16.mxu0 0
    %239 = vmatpush2.bf16.msra.mxu0 0
    %240 = vmatprep.subr.bf16.mxu0 0
    %241 = vmatpush2.bf16.msra.mxu0 0
    %242 = vmatprep.subr.bf16.mxu0 0
    %243 = vmatpush2.bf16.msra.mxu0 0
    %244 = vmatprep.subr.bf16.mxu0 0
    %245 = vmatpush2.bf16.msra.mxu0 0
    %246 = vmatprep.mubr.bf16.mxu0 0
    %247 = vmatmul.mubr.bf16.gmra.mxu0 %v141
    %v248 = vpop.f32.mrf.mxu0
    %v249 = vadd.f32 %v164, %v248
    %v250 = vpop.f32.mrf.mxu0
    %v251 = vpop.f32.mrf.mxu0
    %v252 = vadd.f32 %v164, %v251
    %v253 = vpop.f32.mrf.mxu0
    %254 = vmatprep.mubr.bf16.mxu0 0
    %255 = vmatmul.mubr.bf16.gmra.mxu0 %v142
    %v256 = vpop.f32.mrf.mxu0
    %v257 = vadd.f32 %v164, %v256
    %v258 = vpop.f32.mrf.mxu0
    %v259 = vpop.f32.mrf.mxu0
    %v260 = vadd.f32 %v164, %v259
    %v261 = vpop.f32.mrf.mxu0
    %262 = vdwg.mxu0
    %v263 = vmax.f32 %v249, 0.0
    %v264 = vmax.f32 %v252, 0.0
    %v265 = vmax.f32 %v257, 0.0
    %v266 = vmax.f32 %v260, 0.0
    %v267 = vpack.c.bf16 %v264, %v263
    %v268 = vpack.c.bf16 %v266, %v265
    %v269 = vld [vmem:[%s5] sm:$0xf]
    %v270 = vld [vmem:[%s5 + $0x4] sm:$0xf]
    %v271 = vld [vmem:[%s5 + $0x8] sm:$0xf]
    %v272 = vld [vmem:[%s5 + $0xc] sm:$0xf]
    %v273 = vld [vmem:[%s5 + $0x10] sm:$0xf]
    %v274 = vld [vmem:[%s5 + $0x14] sm:$0xf]
    %v275 = vld [vmem:[%s5 + $0x18] sm:$0xf]
    %v276 = vld [vmem:[%s5 + $0x1c] sm:$0xf]
    %v277 = vld [vmem:[%s6] sm:$0x1]
    %v279 = vlaneseq
    %v280 = vshrl.u32 %v279, 7
    %v281 = vsub.s32 0, %v280
    %v282 = vrot.slane %v277, %v281
    %v292 = vunpack.c.l.b16 %v269
    %v293 = vunpack.c.l.b16 %v270
    %v294 = vunpack.c.l.b16 %v271
    %v295 = vunpack.c.l.b16 %v272
    %v296 = vunpack.c.l.b16 %v273
    %v297 = vunpack.c.l.b16 %v274
    %v298 = vunpack.c.l.b16 %v275
    %v299 = vunpack.c.l.b16 %v276
    %v300 = vpack.c.b16 %v293, %v292
    %v301 = vpack.c.b16 %v295, %v294
    %v302 = vpack.c.b16 %v297, %v296
    %v303 = vpack.c.b16 %v299, %v298
    %v309 = vsel %vm81, %v267, 0
    %v312 = vsel %vm81, %v268, 0
    %314 = vmatprep.subr.bf16.mxu0 0
    %315 = vmatpush1.bf16.msra.mxu0 0
    %316 = vmatprep.subr.bf16.mxu0 0
    %317 = vmatpush1.bf16.msra.mxu0 0
    %318 = vmatprep.subr.bf16.mxu0 0
    %319 = vmatpush1.bf16.msra.mxu0 0
    %320 = vmatprep.subr.bf16.mxu0 0
    %321 = vmatpush1.bf16.msra.mxu0 0
    %322 = vmatprep.subr.bf16.mxu0 0
    %323 = vmatpush1.bf16.msra.mxu0 %v303
    %324 = vmatprep.subr.bf16.mxu0 0
    %325 = vmatpush1.bf16.msra.mxu0 %v302
    %326 = vmatprep.subr.bf16.mxu0 0
    %327 = vmatpush1.bf16.msra.mxu0 %v301
    %328 = vmatprep.subr.bf16.mxu0 0
    %329 = vmatpush1.bf16.msra.mxu0 %v300
    %330 = vmatprep.subr.bf16.mxu0 0
    %331 = vmatpush2.bf16.msra.mxu0 0
    %332 = vmatprep.subr.bf16.mxu0 0
    %333 = vmatpush2.bf16.msra.mxu0 0
    %334 = vmatprep.subr.bf16.mxu0 0
    %335 = vmatpush2.bf16.msra.mxu0 0
    %336 = vmatprep.subr.bf16.mxu0 0
    %337 = vmatpush2.bf16.msra.mxu0 0
    %338 = vmatprep.subr.bf16.mxu0 0
    %339 = vmatpush2.bf16.msra.mxu0 0
    %340 = vmatprep.subr.bf16.mxu0 0
    %341 = vmatpush2.bf16.msra.mxu0 0
    %342 = vmatprep.subr.bf16.mxu0 0
    %343 = vmatpush2.bf16.msra.mxu0 0
    %344 = vmatprep.subr.bf16.mxu0 0
    %345 = vmatpush2.bf16.msra.mxu0 0
    %346 = vmatprep.mubr.bf16.mxu0 0
    %347 = vmatmul.mubr.bf16.gmra.mxu0 %v309
    %v348 = vpop.f32.mrf.mxu0
    %v349 = vadd.f32 %v282, %v348
    %v350 = vpop.f32.mrf.mxu0
    %v351 = vpop.f32.mrf.mxu0
    %v352 = vadd.f32 %v282, %v351
    %v353 = vpop.f32.mrf.mxu0
    %354 = vmatprep.mubr.bf16.mxu0 0
    %355 = vmatmul.mubr.bf16.gmra.mxu0 %v312
    %v356 = vpop.f32.mrf.mxu0
    %v357 = vadd.f32 %v282, %v356
    %v358 = vpop.f32.mrf.mxu0
    %v359 = vpop.f32.mrf.mxu0
    %v360 = vadd.f32 %v282, %v359
    %v361 = vpop.f32.mrf.mxu0
    %362 = vdwg.mxu0
    %363 = vst [vmem:[#allocation2] sm:$0xff] %v349
    %364 = vst [vmem:[#allocation2 + $0x8] sm:$0xff] %v352
    %365 = vst [vmem:[#allocation2 + $0x10] sm:$0xff] %v357
    %366 = vst [vmem:[#allocation2 + $0x18] sm:$0xff] %v360
    // Predicated region
    $region30: #{tpu_custom_call.1} parent=1 // pred_check
      _
    $region31: #{tpu_custom_call.1} parent=1 // pred_check_branch
      %368 = sbr.rel (0) target = $region33
    $region32: #{tpu_custom_call.1} parent=1 // pred_region
      %s370 = ssub.s32 512, 512
      %371 = vsyncadd [#allocation3], %s370
      %s372 = sshll.u32 [#allocation2], 4
      %s373 = int_to_ptr.vmem [resolvable:$true] %s372
      %378 = dma.vmem_to_hbm [thread:$0]  %s373, 512, %s7, [#allocation3], 128, 128, 8
    $region33: #{tpu_custom_call.1} parent=1 // pred_fallthru
      _
    // Predicated region
    $region34: #{tpu_custom_call.1} parent=1 // pred_check
      _
    $region35: #{tpu_custom_call.1} parent=1 // pred_check_branch
      %380 = sbr.rel (0) target = $region37
    $region36: #{tpu_custom_call.1} parent=1 // pred_region
      %381 = dma.done [#allocation3], 512
    $region37: #{tpu_custom_call.1} parent=1 // pred_fallthru
      _
    %382 = vsyncpa [#allocation3], 1

</llo_original>
